<compile_context>
chip_gen: v6e
topology: v6e:2x2x1
jax: 0.10.0
libtpu: 0.0.40
codegen_flags: <defaults>
</compile_context>

<pallas_src>
import functools

import jax
import jax.numpy as jnp
from jax import lax
from jax.experimental import pallas as pl
from jax.experimental.pallas import tpu as pltpu

EPS = 1e-5
LEAKY_SLOPE = 0.01       # nn.LeakyReLU default
HIDDEN = 256
TILE_B_MAX = 1024        # multiple of 128; ~3-4 MiB live tile state -> fits all generations


def _scale_shift(sum_ref, sq_ref, gamma, beta, inv_b):
    """Per-channel BN scale/shift from accumulated sum / sum-of-squares (all (1, H))."""
    mu = sum_ref[...] * inv_b
    var = jnp.maximum(sq_ref[...] * inv_b - mu * mu, 0.0)   # clamp: cancellation guard
    s = gamma * lax.rsqrt(var + EPS)                         # EUP rsqrt on (1, H) only
    t = beta - mu * s
    return s, t


def _bn_leaky(h, s, t):
    y = h * s + t                              # 2 VPU ops / element
    return jnp.maximum(y, LEAKY_SLOPE * y)     # leaky relu without cmp+select


def discriminator_z_kernel(
    x_ref,
    w1_ref, g1_ref, be1_ref,
    w2_ref, g2_ref, be2_ref,
    w3_ref, b3_ref,
    out_ref,
    s1_sum, s1_sq, s2_sum, s2_sq,
    *, batch, tile_b,
):
    p = pl.program_id(0)     # pass: 0 = bn1 stats, 1 = bn2 stats, 2 = normalize + store
    i = pl.program_id(1)     # batch tile
    inv_b = 1.0 / batch                       # true (unpadded) batch size, static
    needs_mask = (batch % tile_b) != 0        # trace-time flag: ragged last tile

    @pl.when(jnp.logical_and(p == 0, i == 0))
    def _init():
        s1_sum[...] = jnp.zeros_like(s1_sum)
        s1_sq[...] = jnp.zeros_like(s1_sq)
        s2_sum[...] = jnp.zeros_like(s2_sum)
        s2_sq[...] = jnp.zeros_like(s2_sq)

    # Layer-1 matmul (bias omitted: cancelled by training-mode BN mean subtraction).
    h1 = jnp.dot(x_ref[...].astype(jnp.bfloat16), w1_ref[...],
                 preferred_element_type=jnp.float32)           # (tile_b, H) f32

    @pl.when(p == 0)
    def _stats1():
        # Zero-padded rows contribute exactly 0 here (zero input, no bias) -> no mask needed.
        s1_sum[...] += jnp.sum(h1, axis=0, keepdims=True)
        s1_sq[...] += jnp.sum(h1 * h1, axis=0, keepdims=True)

    @pl.when(p > 0)
    def _fwd():
        sc1, sh1 = _scale_shift(s1_sum, s1_sq, g1_ref[...], be1_ref[...], inv_b)
        a1 = _bn_leaky(h1, sc1, sh1)
        if needs_mask:
            # Zero out padded rows so they do not pollute the bn2 statistics.
            rows = lax.broadcasted_iota(jnp.int32, a1.shape, 0) + i * tile_b
            a1 = jnp.where(rows < batch, a1, 0.0)

        h2 = jnp.dot(a1.astype(jnp.bfloat16), w2_ref[...],
                     preferred_element_type=jnp.float32)       # (tile_b, H) f32

        @pl.when(p == 1)
        def _stats2():
            s2_sum[...] += jnp.sum(h2, axis=0, keepdims=True)
            s2_sq[...] += jnp.sum(h2 * h2, axis=0, keepdims=True)

        @pl.when(p == 2)
        def _store():
            sc2, sh2 = _scale_shift(s2_sum, s2_sq, g2_ref[...], be2_ref[...], inv_b)
            a2 = _bn_leaky(h2, sc2, sh2)
            # Final Linear(256 -> 1): transposed MXU dot -> lane-major (1, tile_b) logits.
            o = lax.dot_general(
                w3_ref[...], a2.astype(jnp.bfloat16),
                dimension_numbers=(((1,), (1,)), ((), ())),
                preferred_element_type=jnp.float32) + b3_ref[...]
            p_sig = pl.reciprocal(1.0 + jnp.exp(-o), approx=True)   # EUP recip
            out_ref[...] = p_sig.astype(out_ref.dtype)


def discriminator_z(x, params, tile_b_max=TILE_B_MAX):
    """x: (B, z) float32 (or bf16). Returns (B, 1) float32 sigmoid scores."""
    B = x.shape[0]
    x2d = x.reshape(B, -1)                    # mirrors x.view(batch_size, -1)
    Z = x2d.shape[1]

    if B <= tile_b_max:
        tile_b, b_pad = B, B                  # single tile: full-dim blocks, no padding
    else:
        assert tile_b_max % 128 == 0, "tile must be lane-aligned for the (1, tile_b) output"
        tile_b = tile_b_max
        b_pad = pl.cdiv(B, tile_b) * tile_b
        x2d = jnp.pad(x2d, ((0, b_pad - B), (0, 0)))   # zero rows (masked in-kernel)
    nt = b_pad // tile_b

    kernel = functools.partial(discriminator_z_kernel, batch=B, tile_b=tile_b)
    const = lambda p, i: (0, 0)   # parameters: fetched once, stay VMEM-resident

    out = pl.pallas_call(
        kernel,
        out_shape=jax.ShapeDtypeStruct((1, b_pad), jnp.float32),
        grid=(3, nt),
        in_specs=[
            pl.BlockSpec((tile_b, Z), lambda p, i: (i, 0)),    # x: re-read per pass
            pl.BlockSpec((Z, HIDDEN), const),                  # w1 (bf16)
            pl.BlockSpec((1, HIDDEN), const),                  # gamma1
            pl.BlockSpec((1, HIDDEN), const),                  # beta1
            pl.BlockSpec((HIDDEN, HIDDEN), const),             # w2 (bf16)
            pl.BlockSpec((1, HIDDEN), const),                  # gamma2
            pl.BlockSpec((1, HIDDEN), const),                  # beta2
            pl.BlockSpec((1, HIDDEN), const),                  # w3 row (bf16)
            pl.BlockSpec((1, 1), const),                       # b3
        ],
        out_specs=pl.BlockSpec((1, tile_b), lambda p, i: (0, i)),
        scratch_shapes=[pltpu.VMEM((1, HIDDEN), jnp.float32)] * 4,
        compiler_params=pltpu.CompilerParams(
            # Both axes carry a dependency through the BN-stats scratch.
            # TODO(synk): on v7x, split the p==2 (normalize) tiles across the two
            # TensorCores with a CMEM cross-core stats reduce for ~2x on the VALU-bound pass.
            dimension_semantics=("arbitrary", "arbitrary"),
        ),
    )(
        x2d,
        params["w1_bf16"], params["g1"], params["be1"],
        params["w2_bf16"], params["g2"], params["be2"],
        params["w3_bf16"], params["b3"],
    )
    return out[0, :B].reshape(B, 1)


def init_params(key, z_dim, hidden=HIDDEN):
    """Deterministic synthetic parameters (shapes match the PyTorch module)."""
    ks = jax.random.split(key, 6)

    def lin(kw, kb, fan_in, fan_out):
        bound = 1.0 / jnp.sqrt(fan_in)
        w = jax.random.uniform(kw, (fan_in, fan_out), jnp.float32, -bound, bound)
        b = jax.random.uniform(kb, (1, fan_out), jnp.float32, -bound, bound)
        return w, b

    w1, b1 = lin(ks[0], ks[1], z_dim, hidden)
    w2, b2 = lin(ks[2], ks[3], hidden, hidden)
    w3, b3 = lin(ks[4], ks[5], hidden, 1)
    return {
        # f32 masters (used by the f32 module reference)
        "w1": w1, "b1": b1, "w2": w2, "b2": b2, "w3": w3, "b3": b3.reshape(1, 1),
        # bf16 copies consumed by the kernel (halved weight DMA, 2x MXU rate)
        "w1_bf16": w1.astype(jnp.bfloat16),
        "w2_bf16": w2.astype(jnp.bfloat16),
        "w3_bf16": w3.T.astype(jnp.bfloat16),          # (1, hidden) row for transposed dot
        "g1": jnp.ones((1, hidden), jnp.float32), "be1": jnp.zeros((1, hidden), jnp.float32),
        "g2": jnp.ones((1, hidden), jnp.float32), "be2": jnp.zeros((1, hidden), jnp.float32),
    }


def _bn_ref(h, gamma, beta):
    mu = h.mean(0, keepdims=True)
    var = ((h - mu) ** 2).mean(0, keepdims=True)
    return (h - mu) / jnp.sqrt(var + EPS) * gamma + beta


def _leaky_ref(h):
    return jnp.where(h > 0, h, LEAKY_SLOPE * h)


def reference_forward_f32(x, params):
    """Pure-f32 JAX reference of the PyTorch forward (training-mode BN, biases kept)."""
    h = x.reshape(x.shape[0], -1) @ params["w1"] + params["b1"]
    h = _leaky_ref(_bn_ref(h, params["g1"], params["be1"]))
    h = h @ params["w2"] + params["b2"]
    h = _leaky_ref(_bn_ref(h, params["g2"], params["be2"]))
    o = h @ params["w3"] + params["b3"]
    return jax.nn.sigmoid(o)


def reference_forward_bf16(x, params):
    """Reference mirroring the kernel numerics (bf16 weights/activations, no pre-BN bias)."""
    f32 = jnp.float32
    bf = lambda a: a.astype(jnp.bfloat16).astype(f32)
    h = bf(x.reshape(x.shape[0], -1)) @ params["w1_bf16"].astype(f32)
    h = _leaky_ref(_bn_ref(h, params["g1"], params["be1"]))
    h = bf(h) @ params["w2_bf16"].astype(f32)
    h = _leaky_ref(_bn_ref(h, params["g2"], params["be2"]))
    o = bf(h) @ params["w3_bf16"].astype(f32).T + params["b3"]
    return jax.nn.sigmoid(o)


if __name__ == "__main__":
    root = jax.random.PRNGKey(0)

    def check(batch_size, z_dim, tile_b_max):
        kx, kp = jax.random.split(jax.random.fold_in(root, batch_size))
        x = jax.random.normal(kx, (batch_size, z_dim), jnp.float32)
        params = init_params(kp, z_dim)

        out = jax.block_until_ready(discriminator_z(x, params, tile_b_max=tile_b_max))
        assert out.shape == (batch_size, 1)

        # Tight check vs. a reference matching the kernel's bf16 numerics.
        ref_bf16 = reference_forward_bf16(x, params)
        assert jnp.allclose(out, ref_bf16, atol=2e-3, rtol=2e-3), \
            "mismatch vs bf16-matched reference"

        # Loose check vs. the exact f32 PyTorch-semantics reference.
        ref_f32 = reference_forward_f32(x, params)
        assert jnp.allclose(out, ref_f32, atol=5e-2, rtol=5e-2), \
            "mismatch vs f32 module reference"

    # Small single-tile case (grid = (3, 1)).
    check(batch_size=8, z_dim=32, tile_b_max=TILE_B_MAX)
    # Multi-tile case exercising cross-tile BN-stat accumulation and the ragged-tile mask
    # (grid = (3, 3), tile_b = 128, batch padded 300 -> 384).
    check(batch_size=300, z_dim=32, tile_b_max=128)

    print("KERNEL_OK")
</pallas_src>

<mosaic_0001>
module attributes {stable_mosaic.version = 11 : i64} {
  func.func @discriminator_z_kernel(%arg0: i32, %arg1: i32, %arg2: memref<8x32xf32, #tpu.memory_space<vmem>>, %arg3: memref<32x256xbf16, #tpu.memory_space<vmem>>, %arg4: memref<1x256xf32, #tpu.memory_space<vmem>>, %arg5: memref<1x256xf32, #tpu.memory_space<vmem>>, %arg6: memref<256x256xbf16, #tpu.memory_space<vmem>>, %arg7: memref<1x256xf32, #tpu.memory_space<vmem>>, %arg8: memref<1x256xf32, #tpu.memory_space<vmem>>, %arg9: memref<1x256xbf16, #tpu.memory_space<vmem>>, %arg10: memref<1x1xf32, #tpu.memory_space<vmem>>, %arg11: memref<1x8xf32, #tpu.memory_space<vmem>>, %arg12: memref<1x256xf32, #tpu.memory_space<vmem>>, %arg13: memref<1x256xf32, #tpu.memory_space<vmem>>, %arg14: memref<1x256xf32, #tpu.memory_space<vmem>>, %arg15: memref<1x256xf32, #tpu.memory_space<vmem>>) attributes {dimension_semantics = [#tpu.dimension_semantics<arbitrary>, #tpu.dimension_semantics<arbitrary>], iteration_bounds = array<i64: 3, 1>, scalar_prefetch = 0 : i64, scratch_operands = 4 : i64, tpu.core_type = #tpu.core_type<tc>, window_params = [{transform_indices = @transform_0, window_bounds = array<i64: 8, 32>}, {pipeline_mode = #tpu.pipeline_mode<synchronous>, transform_indices = @transform_1, window_bounds = array<i64: 32, 256>}, {pipeline_mode = #tpu.pipeline_mode<synchronous>, transform_indices = @transform_2, window_bounds = array<i64: 1, 256>}, {pipeline_mode = #tpu.pipeline_mode<synchronous>, transform_indices = @transform_3, window_bounds = array<i64: 1, 256>}, {pipeline_mode = #tpu.pipeline_mode<synchronous>, transform_indices = @transform_4, window_bounds = array<i64: 256, 256>}, {pipeline_mode = #tpu.pipeline_mode<synchronous>, transform_indices = @transform_5, window_bounds = array<i64: 1, 256>}, {pipeline_mode = #tpu.pipeline_mode<synchronous>, transform_indices = @transform_6, window_bounds = array<i64: 1, 256>}, {pipeline_mode = #tpu.pipeline_mode<synchronous>, transform_indices = @transform_7, window_bounds = array<i64: 1, 256>}, {pipeline_mode = #tpu.pipeline_mode<synchronous>, transform_indices = @transform_8, window_bounds = array<i64: 1, 1>}, {transform_indices = @transform_9, window_bounds = array<i64: 1, 8>}]} {
    %c0_i32 = arith.constant 0 : i32
    %0 = arith.cmpi eq, %arg0, %c0_i32 : i32
    %c0_i32_0 = arith.constant 0 : i32
    %1 = arith.cmpi eq, %arg1, %c0_i32_0 : i32
    %2 = arith.andi %0, %1 : i1
    %3 = arith.extui %2 : i1 to i32
    %c0_i32_1 = arith.constant 0 : i32
    %4 = arith.cmpi ne, %3, %c0_i32_1 : i32
    scf.if %4 {
      %cst_9 = arith.constant 0.000000e+00 : f32
      %15 = vector.broadcast %cst_9 : f32 to vector<1x256xf32>
      %c0_10 = arith.constant 0 : index
      %c0_11 = arith.constant 0 : index
      %16 = vector.load %arg12[%c0_10, %c0_11] : memref<1x256xf32, #tpu.memory_space<vmem>>, vector<1x256xf32>
      tpu.vector_store %arg12[%c0_10, %c0_11], %15 {strides = array<i32>} : memref<1x256xf32, #tpu.memory_space<vmem>>, vector<1x256xf32>,
      %cst_12 = arith.constant 0.000000e+00 : f32
      %17 = vector.broadcast %cst_12 : f32 to vector<1x256xf32>
      %c0_13 = arith.constant 0 : index
      %c0_14 = arith.constant 0 : index
      %18 = vector.load %arg13[%c0_13, %c0_14] : memref<1x256xf32, #tpu.memory_space<vmem>>, vector<1x256xf32>
      tpu.vector_store %arg13[%c0_13, %c0_14], %17 {strides = array<i32>} : memref<1x256xf32, #tpu.memory_space<vmem>>, vector<1x256xf32>,
      %cst_15 = arith.constant 0.000000e+00 : f32
      %19 = vector.broadcast %cst_15 : f32 to vector<1x256xf32>
      %c0_16 = arith.constant 0 : index
      %c0_17 = arith.constant 0 : index
      %20 = vector.load %arg14[%c0_16, %c0_17] : memref<1x256xf32, #tpu.memory_space<vmem>>, vector<1x256xf32>
      tpu.vector_store %arg14[%c0_16, %c0_17], %19 {strides = array<i32>} : memref<1x256xf32, #tpu.memory_space<vmem>>, vector<1x256xf32>,
      %cst_18 = arith.constant 0.000000e+00 : f32
      %21 = vector.broadcast %cst_18 : f32 to vector<1x256xf32>
      %c0_19 = arith.constant 0 : index
      %c0_20 = arith.constant 0 : index
      %22 = vector.load %arg15[%c0_19, %c0_20] : memref<1x256xf32, #tpu.memory_space<vmem>>, vector<1x256xf32>
      tpu.vector_store %arg15[%c0_19, %c0_20], %21 {strides = array<i32>} : memref<1x256xf32, #tpu.memory_space<vmem>>, vector<1x256xf32>,
    } else {
    }
    %c0 = arith.constant 0 : index
    %c0_2 = arith.constant 0 : index
    %5 = vector.load %arg2[%c0, %c0_2] : memref<8x32xf32, #tpu.memory_space<vmem>>, vector<8x32xf32>
    %6 = arith.truncf %5 : vector<8x32xf32> to vector<8x32xbf16>
    %c0_3 = arith.constant 0 : index
    %c0_4 = arith.constant 0 : index
    %7 = vector.load %arg3[%c0_3, %c0_4] : memref<32x256xbf16, #tpu.memory_space<vmem>>, vector<32x256xbf16>
    %cst = arith.constant dense<0.000000e+00> : vector<8x256xf32>
    %8 = tpu.matmul %6, %7, %cst {dimension_numbers = #tpu.dot_dimension_numbers<[1], [0], [0], [1], [0, 0, 1, 1], [], []>} : vector<8x32xbf16>, vector<32x256xbf16>, vector<8x256xf32> -> vector<8x256xf32>
    %c0_i32_5 = arith.constant 0 : i32
    %9 = arith.cmpi eq, %arg0, %c0_i32_5 : i32
    %10 = arith.extui %9 : i1 to i32
    %c0_i32_6 = arith.constant 0 : i32
    %11 = arith.cmpi ne, %10, %c0_i32_6 : i32
    scf.if %11 {
      %c0_9 = arith.constant 0 : index
      %c0_10 = arith.constant 0 : index
      %15 = vector.load %arg12[%c0_9, %c0_10] : memref<1x256xf32, #tpu.memory_space<vmem>>, vector<1x256xf32>
      %cst_11 = arith.constant dense<0.000000e+00> : vector<256xf32>
      %16 = vector.multi_reduction <add>, %8, %cst_11 [0] : vector<8x256xf32> to vector<256xf32>
      %17 = vector.shape_cast %16 : vector<256xf32> to vector<1x256xf32>
      %18 = arith.addf %15, %17 : vector<1x256xf32>
      %c0_12 = arith.constant 0 : index
      %c0_13 = arith.constant 0 : index
      %19 = vector.load %arg12[%c0_12, %c0_13] : memref<1x256xf32, #tpu.memory_space<vmem>>, vector<1x256xf32>
      tpu.vector_store %arg12[%c0_12, %c0_13], %18 {strides = array<i32>} : memref<1x256xf32, #tpu.memory_space<vmem>>, vector<1x256xf32>,
      %c0_14 = arith.constant 0 : index
      %c0_15 = arith.constant 0 : index
      %20 = vector.load %arg13[%c0_14, %c0_15] : memref<1x256xf32, #tpu.memory_space<vmem>>, vector<1x256xf32>
      %21 = arith.mulf %8, %8 : vector<8x256xf32>
      %cst_16 = arith.constant dense<0.000000e+00> : vector<256xf32>
      %22 = vector.multi_reduction <add>, %21, %cst_16 [0] : vector<8x256xf32> to vector<256xf32>
      %23 = vector.shape_cast %22 : vector<256xf32> to vector<1x256xf32>
      %24 = arith.addf %20, %23 : vector<1x256xf32>
      %c0_17 = arith.constant 0 : index
      %c0_18 = arith.constant 0 : index
      %25 = vector.load %arg13[%c0_17, %c0_18] : memref<1x256xf32, #tpu.memory_space<vmem>>, vector<1x256xf32>
      tpu.vector_store %arg13[%c0_17, %c0_18], %24 {strides = array<i32>} : memref<1x256xf32, #tpu.memory_space<vmem>>, vector<1x256xf32>,
    } else {
    }
    %c0_i32_7 = arith.constant 0 : i32
    %12 = arith.cmpi sgt, %arg0, %c0_i32_7 : i32
    %13 = arith.extui %12 : i1 to i32
    %c0_i32_8 = arith.constant 0 : i32
    %14 = arith.cmpi ne, %13, %c0_i32_8 : i32
    scf.if %14 {
      %c0_9 = arith.constant 0 : index
      %c0_10 = arith.constant 0 : index
      %15 = vector.load %arg4[%c0_9, %c0_10] : memref<1x256xf32, #tpu.memory_space<vmem>>, vector<1x256xf32>
      %c0_11 = arith.constant 0 : index
      %c0_12 = arith.constant 0 : index
      %16 = vector.load %arg5[%c0_11, %c0_12] : memref<1x256xf32, #tpu.memory_space<vmem>>, vector<1x256xf32>
      %c0_13 = arith.constant 0 : index
      %c0_14 = arith.constant 0 : index
      %17 = vector.load %arg12[%c0_13, %c0_14] : memref<1x256xf32, #tpu.memory_space<vmem>>, vector<1x256xf32>
      %cst_15 = arith.constant 1.250000e-01 : f32
      %18 = vector.broadcast %cst_15 : f32 to vector<1x256xf32>
      %19 = arith.mulf %17, %18 : vector<1x256xf32>
      %c0_16 = arith.constant 0 : index
      %c0_17 = arith.constant 0 : index
      %20 = vector.load %arg13[%c0_16, %c0_17] : memref<1x256xf32, #tpu.memory_space<vmem>>, vector<1x256xf32>
      %cst_18 = arith.constant 1.250000e-01 : f32
      %21 = vector.broadcast %cst_18 : f32 to vector<1x256xf32>
      %22 = arith.mulf %20, %21 : vector<1x256xf32>
      %23 = arith.mulf %19, %19 : vector<1x256xf32>
      %24 = arith.subf %22, %23 : vector<1x256xf32>
      %cst_19 = arith.constant 0.000000e+00 : f32
      %25 = vector.broadcast %cst_19 : f32 to vector<1x256xf32>
      %26 = arith.maximumf %24, %25 : vector<1x256xf32>
      %cst_20 = arith.constant 9.99999974E-6 : f32
      %27 = vector.broadcast %cst_20 : f32 to vector<1x256xf32>
      %28 = arith.addf %26, %27 : vector<1x256xf32>
      %29 = math.rsqrt %28 : vector<1x256xf32>
      %30 = arith.mulf %15, %29 : vector<1x256xf32>
      %31 = arith.mulf %19, %30 : vector<1x256xf32>
      %32 = arith.subf %16, %31 : vector<1x256xf32>
      %33 = vector.broadcast %30 : vector<1x256xf32> to vector<8x256xf32>
      %34 = arith.mulf %8, %33 : vector<8x256xf32>
      %35 = vector.broadcast %32 : vector<1x256xf32> to vector<8x256xf32>
      %36 = arith.addf %34, %35 : vector<8x256xf32>
      %cst_21 = arith.constant 0.00999999977 : f32
      %37 = vector.broadcast %cst_21 : f32 to vector<8x256xf32>
      %38 = arith.mulf %37, %36 : vector<8x256xf32>
      %39 = arith.maximumf %36, %38 : vector<8x256xf32>
      %40 = arith.truncf %39 : vector<8x256xf32> to vector<8x256xbf16>
      %c0_22 = arith.constant 0 : index
      %c0_23 = arith.constant 0 : index
      %41 = vector.load %arg6[%c0_22, %c0_23] : memref<256x256xbf16, #tpu.memory_space<vmem>>, vector<256x256xbf16>
      %cst_24 = arith.constant dense<0.000000e+00> : vector<8x256xf32>
      %42 = tpu.matmul %40, %41, %cst_24 {dimension_numbers = #tpu.dot_dimension_numbers<[1], [0], [0], [1], [0, 0, 1, 1], [], []>} : vector<8x256xbf16>, vector<256x256xbf16>, vector<8x256xf32> -> vector<8x256xf32>
      %c1_i32 = arith.constant 1 : i32
      %43 = arith.cmpi eq, %arg0, %c1_i32 : i32
      %44 = arith.extui %43 : i1 to i32
      %c0_i32_25 = arith.constant 0 : i32
      %45 = arith.cmpi ne, %44, %c0_i32_25 : i32
      scf.if %45 {
        %c0_27 = arith.constant 0 : index
        %c0_28 = arith.constant 0 : index
        %49 = vector.load %arg14[%c0_27, %c0_28] : memref<1x256xf32, #tpu.memory_space<vmem>>, vector<1x256xf32>
        %cst_29 = arith.constant dense<0.000000e+00> : vector<256xf32>
        %50 = vector.multi_reduction <add>, %42, %cst_29 [0] : vector<8x256xf32> to vector<256xf32>
        %51 = vector.shape_cast %50 : vector<256xf32> to vector<1x256xf32>
        %52 = arith.addf %49, %51 : vector<1x256xf32>
        %c0_30 = arith.constant 0 : index
        %c0_31 = arith.constant 0 : index
        %53 = vector.load %arg14[%c0_30, %c0_31] : memref<1x256xf32, #tpu.memory_space<vmem>>, vector<1x256xf32>
        tpu.vector_store %arg14[%c0_30, %c0_31], %52 {strides = array<i32>} : memref<1x256xf32, #tpu.memory_space<vmem>>, vector<1x256xf32>,
        %c0_32 = arith.constant 0 : index
        %c0_33 = arith.constant 0 : index
        %54 = vector.load %arg15[%c0_32, %c0_33] : memref<1x256xf32, #tpu.memory_space<vmem>>, vector<1x256xf32>
        %55 = arith.mulf %42, %42 : vector<8x256xf32>
        %cst_34 = arith.constant dense<0.000000e+00> : vector<256xf32>
        %56 = vector.multi_reduction <add>, %55, %cst_34 [0] : vector<8x256xf32> to vector<256xf32>
        %57 = vector.shape_cast %56 : vector<256xf32> to vector<1x256xf32>
        %58 = arith.addf %54, %57 : vector<1x256xf32>
        %c0_35 = arith.constant 0 : index
        %c0_36 = arith.constant 0 : index
        %59 = vector.load %arg15[%c0_35, %c0_36] : memref<1x256xf32, #tpu.memory_space<vmem>>, vector<1x256xf32>
        tpu.vector_store %arg15[%c0_35, %c0_36], %58 {strides = array<i32>} : memref<1x256xf32, #tpu.memory_space<vmem>>, vector<1x256xf32>,
      } else {
      }
      %c2_i32 = arith.constant 2 : i32
      %46 = arith.cmpi eq, %arg0, %c2_i32 : i32
      %47 = arith.extui %46 : i1 to i32
      %c0_i32_26 = arith.constant 0 : i32
      %48 = arith.cmpi ne, %47, %c0_i32_26 : i32
      scf.if %48 {
        %c0_27 = arith.constant 0 : index
        %c0_28 = arith.constant 0 : index
        %49 = vector.load %arg7[%c0_27, %c0_28] : memref<1x256xf32, #tpu.memory_space<vmem>>, vector<1x256xf32>
        %c0_29 = arith.constant 0 : index
        %c0_30 = arith.constant 0 : index
        %50 = vector.load %arg8[%c0_29, %c0_30] : memref<1x256xf32, #tpu.memory_space<vmem>>, vector<1x256xf32>
        %c0_31 = arith.constant 0 : index
        %c0_32 = arith.constant 0 : index
        %51 = vector.load %arg14[%c0_31, %c0_32] : memref<1x256xf32, #tpu.memory_space<vmem>>, vector<1x256xf32>
        %cst_33 = arith.constant 1.250000e-01 : f32
        %52 = vector.broadcast %cst_33 : f32 to vector<1x256xf32>
        %53 = arith.mulf %51, %52 : vector<1x256xf32>
        %c0_34 = arith.constant 0 : index
        %c0_35 = arith.constant 0 : index
        %54 = vector.load %arg15[%c0_34, %c0_35] : memref<1x256xf32, #tpu.memory_space<vmem>>, vector<1x256xf32>
        %cst_36 = arith.constant 1.250000e-01 : f32
        %55 = vector.broadcast %cst_36 : f32 to vector<1x256xf32>
        %56 = arith.mulf %54, %55 : vector<1x256xf32>
        %57 = arith.mulf %53, %53 : vector<1x256xf32>
        %58 = arith.subf %56, %57 : vector<1x256xf32>
        %cst_37 = arith.constant 0.000000e+00 : f32
        %59 = vector.broadcast %cst_37 : f32 to vector<1x256xf32>
        %60 = arith.maximumf %58, %59 : vector<1x256xf32>
        %cst_38 = arith.constant 9.99999974E-6 : f32
        %61 = vector.broadcast %cst_38 : f32 to vector<1x256xf32>
        %62 = arith.addf %60, %61 : vector<1x256xf32>
        %63 = math.rsqrt %62 : vector<1x256xf32>
        %64 = arith.mulf %49, %63 : vector<1x256xf32>
        %65 = arith.mulf %53, %64 : vector<1x256xf32>
        %66 = arith.subf %50, %65 : vector<1x256xf32>
        %67 = vector.broadcast %64 : vector<1x256xf32> to vector<8x256xf32>
        %68 = arith.mulf %42, %67 : vector<8x256xf32>
        %69 = vector.broadcast %66 : vector<1x256xf32> to vector<8x256xf32>
        %70 = arith.addf %68, %69 : vector<8x256xf32>
        %cst_39 = arith.constant 0.00999999977 : f32
        %71 = vector.broadcast %cst_39 : f32 to vector<8x256xf32>
        %72 = arith.mulf %71, %70 : vector<8x256xf32>
        %73 = arith.maximumf %70, %72 : vector<8x256xf32>
        %c0_40 = arith.constant 0 : index
        %c0_41 = arith.constant 0 : index
        %74 = vector.load %arg9[%c0_40, %c0_41] : memref<1x256xbf16, #tpu.memory_space<vmem>>, vector<1x256xbf16>
        %75 = arith.truncf %73 : vector<8x256xf32> to vector<8x256xbf16>
        %cst_42 = arith.constant dense<0.000000e+00> : vector<1x8xf32>
        %76 = tpu.matmul %74, %75, %cst_42 {dimension_numbers = #tpu.dot_dimension_numbers<[1], [1], [0], [0], [0, 0, 1, 0], [], []>} : vector<1x256xbf16>, vector<8x256xbf16>, vector<1x8xf32> -> vector<1x8xf32>
        %c0_43 = arith.constant 0 : index
        %c0_44 = arith.constant 0 : index
        %77 = vector.load %arg10[%c0_43, %c0_44] : memref<1x1xf32, #tpu.memory_space<vmem>>, vector<1x1xf32>
        %78 = vector.broadcast %77 : vector<1x1xf32> to vector<1x8xf32>
        %79 = arith.addf %76, %78 : vector<1x8xf32>
        %cst_45 = arith.constant 0.000000e+00 : f32
        %80 = vector.broadcast %cst_45 : f32 to vector<1x8xf32>
        %81 = arith.subf %80, %79 : vector<1x8xf32>
        %82 = math.exp %81 : vector<1x8xf32>
        %cst_46 = arith.constant 1.000000e+00 : f32
        %83 = vector.broadcast %cst_46 : f32 to vector<1x8xf32>
        %84 = arith.addf %83, %82 : vector<1x8xf32>
        %85 = tpu.reciprocal %84 {approx = true} : vector<1x8xf32> -> vector<1x8xf32>
        %c0_47 = arith.constant 0 : index
        %c0_48 = arith.constant 0 : index
        %86 = vector.load %arg11[%c0_47, %c0_48] : memref<1x8xf32, #tpu.memory_space<vmem>>, vector<1x8xf32>
        tpu.vector_store %arg11[%c0_47, %c0_48], %85 {strides = array<i32>} : memref<1x8xf32, #tpu.memory_space<vmem>>, vector<1x8xf32>,
      } else {
      }
    } else {
    }
    return
  }
  func.func @transform_0(%arg0: i32, %arg1: i32) -> (i32, i32) {
    %c0_i32 = arith.constant 0 : i32
    %c0_i32_0 = arith.constant 0 : i32
    return %arg1, %c0_i32 : i32, i32
  }
  func.func @transform_1(%arg0: i32, %arg1: i32) -> (i32, i32) {
    %c0_i32 = arith.constant 0 : i32
    %c0_i32_0 = arith.constant 0 : i32
    %c0_i32_1 = arith.constant 0 : i32
    return %c0_i32, %c0_i32_0 : i32, i32
  }
  func.func @transform_2(%arg0: i32, %arg1: i32) -> (i32, i32) {
    %c0_i32 = arith.constant 0 : i32
    %c0_i32_0 = arith.constant 0 : i32
    %c0_i32_1 = arith.constant 0 : i32
    return %c0_i32, %c0_i32_0 : i32, i32
  }
  func.func @transform_3(%arg0: i32, %arg1: i32) -> (i32, i32) {
    %c0_i32 = arith.constant 0 : i32
    %c0_i32_0 = arith.constant 0 : i32
    %c0_i32_1 = arith.constant 0 : i32
    return %c0_i32, %c0_i32_0 : i32, i32
  }
  func.func @transform_4(%arg0: i32, %arg1: i32) -> (i32, i32) {
    %c0_i32 = arith.constant 0 : i32
    %c0_i32_0 = arith.constant 0 : i32
    %c0_i32_1 = arith.constant 0 : i32
    return %c0_i32, %c0_i32_0 : i32, i32
  }
  func.func @transform_5(%arg0: i32, %arg1: i32) -> (i32, i32) {
    %c0_i32 = arith.constant 0 : i32
    %c0_i32_0 = arith.constant 0 : i32
    %c0_i32_1 = arith.constant 0 : i32
    return %c0_i32, %c0_i32_0 : i32, i32
  }
  func.func @transform_6(%arg0: i32, %arg1: i32) -> (i32, i32) {
    %c0_i32 = arith.constant 0 : i32
    %c0_i32_0 = arith.constant 0 : i32
    %c0_i32_1 = arith.constant 0 : i32
    return %c0_i32, %c0_i32_0 : i32, i32
  }
  func.func @transform_7(%arg0: i32, %arg1: i32) -> (i32, i32) {
    %c0_i32 = arith.constant 0 : i32
    %c0_i32_0 = arith.constant 0 : i32
    %c0_i32_1 = arith.constant 0 : i32
    return %c0_i32, %c0_i32_0 : i32, i32
  }
  func.func @transform_8(%arg0: i32, %arg1: i32) -> (i32, i32) {
    %c0_i32 = arith.constant 0 : i32
    %c0_i32_0 = arith.constant 0 : i32
    %c0_i32_1 = arith.constant 0 : i32
    return %c0_i32, %c0_i32_0 : i32, i32
  }
  func.func @transform_9(%arg0: i32, %arg1: i32) -> (i32, i32) {
    %c0_i32 = arith.constant 0 : i32
    %c0_i32_0 = arith.constant 0 : i32
    return %c0_i32, %arg1 : i32, i32
  }
}

</mosaic_0001>

<llo_original>
// kernel: tpu_custom_call.1
$region0: #{tpu_custom_call.1}
  #allocation0 [shape = 'u32[]', space=smem, size = 0x4, offset = 0x4, fixed_abs, tag = 'smem constant byte address 0x4 - core index']
  #allocation1 [shape = 'u32[144,128]{1,0:T(1,128)}', space=vmem, size = 0x12000, scoped, tag = 'internal scratch']
  #allocation2 [shape = 'f32[1,256]{1,0:T(1,128)}', space=vmem, size = 0x400, scoped, tag = 'scratch operand']
  #allocation3 [shape = 'f32[1,256]{1,0:T(1,128)}', space=vmem, size = 0x400, scoped, tag = 'scratch operand']
  #allocation4 [shape = 'f32[1,256]{1,0:T(1,128)}', space=vmem, size = 0x400, scoped, tag = 'scratch operand']
  #allocation5 [shape = 'f32[1,256]{1,0:T(1,128)}', space=vmem, size = 0x400, scoped, tag = 'scratch operand']
  #allocation6 [shape = 'f32[1,1]{1,0:T(1,128)S(1)}', space=vmem, size = 0x200, scoped, tag = 'scoped memory for tpu_custom_call.1']
  %s0 = inlined_call_operand.hbm [shape: f32[8,32], index: 0, kind: input, shape index: {}]
  %s1 = inlined_call_operand.hbm [shape: bf16[32,256], index: 1, kind: input, shape index: {}]
  %s2 = inlined_call_operand.vmem [shape: f32[1,256], index: 2, kind: input, shape index: {}]
  %s3 = inlined_call_operand.vmem [shape: f32[1,256], index: 3, kind: input, shape index: {}]
  %s4 = inlined_call_operand.hbm [shape: bf16[256,256], index: 4, kind: input, shape index: {}]
  %s5 = inlined_call_operand.vmem [shape: f32[1,256], index: 5, kind: input, shape index: {}]
  %s6 = inlined_call_operand.vmem [shape: f32[1,256], index: 6, kind: input, shape index: {}]
  %s7 = inlined_call_operand.vmem [shape: bf16[1,256], index: 7, kind: input, shape index: {}]
  %s8 = inlined_call_operand.<no memory space> [shape: f32[1,1], index: 8, kind: input, shape index: {}]
  %s9 = inlined_call_operand.hbm [shape: f32[1,8], index: 9, kind: output, shape index: {}]
  %s10 = sld [smem:[#allocation0]]
  $region101: #{tpu_custom_call.1} parent=0
    _
  %s12 = ssub.s32 1, %s10
  %s13 = scalar_select 0, %s12, %s10
  %v14 = vstv %s8
  %15 = vst [vmem:[#allocation6] sm:$0x1] %v14
  $region1: #{tpu_custom_call.1} parent=0
    #allocation7 [shape = 'u8[4096]{0}', space=vmem, size = 0x1000, scoped, tag = 'input window, operand 0, single buffered']
    #allocation8 [shape = 's32[2]{0}', space=sflag, size = 0x8, scoped, tag = 'scoped memory for tpu_custom_call.1']
    #allocation9 [shape = 's32[2]{0}', space=sflag, size = 0x8, scoped, tag = 'scoped memory for tpu_custom_call.1']
    #allocation10 [shape = 'u8[16384]{0}', space=vmem, size = 0x4000, scoped, tag = 'input window, operand 1, single buffered']
    #allocation11 [shape = 's32[1]{0}', space=sflag, size = 0x4, scoped, tag = 'scoped memory for tpu_custom_call.1']
    #allocation12 [shape = 'u8[131072]{0}', space=vmem, size = 0x20000, scoped, tag = 'input window, operand 4, single buffered']
    #allocation13 [shape = 'u8[512]{0}', space=vmem, size = 0x400, scoped, tag = 'output window, operand 0, single buffered']
    %16 = vsyncpa [#allocation8], 0
    %17 = vsyncpa [#allocation11], 0
    %18 = vsyncpa [#allocation9], 0
    loop: start=0, step=1, limit=5
    $region2: #{tpu_custom_call.1} parent=1 // loop_pre_header
      _
    $region3: #{tpu_custom_call.1} parent=1 // loop_header
      %s20 = sphi 0, %s24
      %p21 = scmp.ge.s32.totalorder %s20, 5
      %s27 = sphi 0, %s39
      %s28 = sphi 0, %s35
      %s29 = sphi 0, %s27
      %s30 = sphi 0, %s28
      %s31 = sphi 0, %s29
      %s32 = sphi 0, %s30
      %s42 = sphi 0, %s44
      %s45 = sphi 0, %s42
      %s46 = sphi 0, %s45
      %s62 = sphi 0, %s46
      %s66 = sphi 0, %s66
      %s68 = sphi 0, %s66
      %s69 = sphi 0, %s68
      %s83 = sphi 0, %s69
      %s87 = sphi 0, %s87
      %s89 = sphi 0, %s87
      %s90 = sphi 0, %s89
      %s104 = sphi 0, %s90
      %s108 = sphi 0, %s108
      %s110 = sphi 0, %s108
      %s111 = sphi 0, %s110
      %s125 = sphi 0, %s111
      %s129 = sphi 0, %s129
      %s131 = sphi 0, %s129
      %s132 = sphi 0, %s131
      %s146 = sphi 0, %s132
      %s150 = sphi 0, %s150
      %s152 = sphi 0, %s150
      %s153 = sphi 0, %s152
      %s167 = sphi 0, %s153
      %s171 = sphi 0, %s171
      %s173 = sphi 0, %s171
      %s174 = sphi 0, %s173
      %s188 = sphi 0, %s174
      %s192 = sphi 0, %s192
      %s194 = sphi 0, %s192
      %s195 = sphi 0, %s194
      %s209 = sphi 0, %s195
      %s213 = sphi 0, %s213
      %s215 = sphi 0, %s213
      %s216 = sphi 0, %s215
      %s230 = sphi 0, %s216
      %s236 = sphi 0, %s238
      %s239 = sphi 0, %s236
      %s240 = sphi 0, %s239
      %s256 = sphi 0, %s240
    $region4: #{tpu_custom_call.1} parent=1 // loop_header_branch
      %23 = sbr.rel (%p21) target = $region8
    $region5: #{tpu_custom_call.1} parent=1 // loop_body
      %s25 = ssub.s32 %s20, 1
      %s26 = ssub.s32 %s20, 2
      %s33 = sadd.s32 1, %s28
      %p34 = scmp.ge.s32.totalorder %s33, 1
      %s35 = scalar_select %p34, 0, %s33
      %s36 = sadd.s32 1, %s27
      %s37 = scalar_select %p34, %s36, %s27
      %p38 = scmp.ge.s32.totalorder %s37, 3
      %s39 = scalar_select %p38, 0, %s37
      %s40 = ssub.s32 %s28, %s35
      %p41 = scmp.eq.s32.totalorder %s40, 0
      %s43 = sadd.s32 %s42, 1
      %s44 = scalar_select %p41, %s42, %s43
      %p47 = pneg %p41
      %p48 = scmp.eq.s32.totalorder %s20, 2
      %p49 = por %p47, %p48
      %p50 = scmp.ne.s32.totalorder %s42, %s45
      %p51 = scmp.eq.s32.totalorder %s20, 0
      %p52 = por %p50, %p51
      %p53 = scmp.ne.s32.totalorder %s42, %s45
      %p54 = scmp.eq.s32.totalorder %s25, 2
      %p55 = por %p53, %p54
      %p56 = scmp.ne.s32.totalorder %s45, %s46
      %p57 = scmp.eq.s32.totalorder %s25, 0
      %p58 = por %p56, %p57
      %p59 = scmp.ne.s32.totalorder %s45, %s46
      %p60 = scmp.eq.s32.totalorder %s26, 2
      %p61 = por %p59, %p60
      %p63 = scmp.ne.s32.totalorder %s46, %s62
      %p64 = scmp.eq.s32.totalorder %s26, 0
      %p65 = por %p63, %p64
      %s67 = sadd.s32 %s66, 1
      %p70 = scmp.eq.s32.totalorder %s20, 2
      %p71 = scmp.ne.s32.totalorder %s66, %s68
      %p72 = scmp.eq.s32.totalorder %s20, 0
      %p73 = por %p71, %p72
      %p74 = scmp.ne.s32.totalorder %s66, %s68
      %p75 = scmp.eq.s32.totalorder %s25, 2
      %p76 = por %p74, %p75
      %p77 = scmp.ne.s32.totalorder %s68, %s69
      %p78 = scmp.eq.s32.totalorder %s25, 0
      %p79 = por %p77, %p78
      %p80 = scmp.ne.s32.totalorder %s68, %s69
      %p81 = scmp.eq.s32.totalorder %s26, 2
      %p82 = por %p80, %p81
      %p84 = scmp.ne.s32.totalorder %s69, %s83
      %p85 = scmp.eq.s32.totalorder %s26, 0
      %p86 = por %p84, %p85
      %s88 = sadd.s32 %s87, 1
      %p91 = scmp.eq.s32.totalorder %s20, 2
      %p92 = scmp.ne.s32.totalorder %s87, %s89
      %p93 = scmp.eq.s32.totalorder %s20, 0
      %p94 = por %p92, %p93
      %p95 = scmp.ne.s32.totalorder %s87, %s89
      %p96 = scmp.eq.s32.totalorder %s25, 2
      %p97 = por %p95, %p96
      %p98 = scmp.ne.s32.totalorder %s89, %s90
      %p99 = scmp.eq.s32.totalorder %s25, 0
      %p100 = por %p98, %p99
      %p101 = scmp.ne.s32.totalorder %s89, %s90
      %p102 = scmp.eq.s32.totalorder %s26, 2
      %p103 = por %p101, %p102
      %p105 = scmp.ne.s32.totalorder %s90, %s104
      %p106 = scmp.eq.s32.totalorder %s26, 0
      %p107 = por %p105, %p106
      %s109 = sadd.s32 %s108, 1
      %p112 = scmp.eq.s32.totalorder %s20, 2
      %p113 = scmp.ne.s32.totalorder %s108, %s110
      %p114 = scmp.eq.s32.totalorder %s20, 0
      %p115 = por %p113, %p114
      %p116 = scmp.ne.s32.totalorder %s108, %s110
      %p117 = scmp.eq.s32.totalorder %s25, 2
      %p118 = por %p116, %p117
      %p119 = scmp.ne.s32.totalorder %s110, %s111
      %p120 = scmp.eq.s32.totalorder %s25, 0
      %p121 = por %p119, %p120
      %p122 = scmp.ne.s32.totalorder %s110, %s111
      %p123 = scmp.eq.s32.totalorder %s26, 2
      %p124 = por %p122, %p123
      %p126 = scmp.ne.s32.totalorder %s111, %s125
      %p127 = scmp.eq.s32.totalorder %s26, 0
      %p128 = por %p126, %p127
      %s130 = sadd.s32 %s129, 1
      %p133 = scmp.eq.s32.totalorder %s20, 2
      %p134 = scmp.ne.s32.totalorder %s129, %s131
      %p135 = scmp.eq.s32.totalorder %s20, 0
      %p136 = por %p134, %p135
      %p137 = scmp.ne.s32.totalorder %s129, %s131
      %p138 = scmp.eq.s32.totalorder %s25, 2
      %p139 = por %p137, %p138
      %p140 = scmp.ne.s32.totalorder %s131, %s132
      %p141 = scmp.eq.s32.totalorder %s25, 0
      %p142 = por %p140, %p141
      %p143 = scmp.ne.s32.totalorder %s131, %s132
      %p144 = scmp.eq.s32.totalorder %s26, 2
      %p145 = por %p143, %p144
      %p147 = scmp.ne.s32.totalorder %s132, %s146
      %p148 = scmp.eq.s32.totalorder %s26, 0
      %p149 = por %p147, %p148
      %s151 = sadd.s32 %s150, 1
      %p154 = scmp.eq.s32.totalorder %s20, 2
      %p155 = scmp.ne.s32.totalorder %s150, %s152
      %p156 = scmp.eq.s32.totalorder %s20, 0
      %p157 = por %p155, %p156
      %p158 = scmp.ne.s32.totalorder %s150, %s152
      %p159 = scmp.eq.s32.totalorder %s25, 2
      %p160 = por %p158, %p159
      %p161 = scmp.ne.s32.totalorder %s152, %s153
      %p162 = scmp.eq.s32.totalorder %s25, 0
      %p163 = por %p161, %p162
      %p164 = scmp.ne.s32.totalorder %s152, %s153
      %p165 = scmp.eq.s32.totalorder %s26, 2
      %p166 = por %p164, %p165
      %p168 = scmp.ne.s32.totalorder %s153, %s167
      %p169 = scmp.eq.s32.totalorder %s26, 0
      %p170 = por %p168, %p169
      %s172 = sadd.s32 %s171, 1
      %p175 = scmp.eq.s32.totalorder %s20, 2
      %p176 = scmp.ne.s32.totalorder %s171, %s173
      %p177 = scmp.eq.s32.totalorder %s20, 0
      %p178 = por %p176, %p177
      %p179 = scmp.ne.s32.totalorder %s171, %s173
      %p180 = scmp.eq.s32.totalorder %s25, 2
      %p181 = por %p179, %p180
      %p182 = scmp.ne.s32.totalorder %s173, %s174
      %p183 = scmp.eq.s32.totalorder %s25, 0
      %p184 = por %p182, %p183
      %p185 = scmp.ne.s32.totalorder %s173, %s174
      %p186 = scmp.eq.s32.totalorder %s26, 2
      %p187 = por %p185, %p186
      %p189 = scmp.ne.s32.totalorder %s174, %s188
      %p190 = scmp.eq.s32.totalorder %s26, 0
      %p191 = por %p189, %p190
      %s193 = sadd.s32 %s192, 1
      %p196 = scmp.eq.s32.totalorder %s20, 2
      %p197 = scmp.ne.s32.totalorder %s192, %s194
      %p198 = scmp.eq.s32.totalorder %s20, 0
      %p199 = por %p197, %p198
      %p200 = scmp.ne.s32.totalorder %s192, %s194
      %p201 = scmp.eq.s32.totalorder %s25, 2
      %p202 = por %p200, %p201
      %p203 = scmp.ne.s32.totalorder %s194, %s195
      %p204 = scmp.eq.s32.totalorder %s25, 0
      %p205 = por %p203, %p204
      %p206 = scmp.ne.s32.totalorder %s194, %s195
      %p207 = scmp.eq.s32.totalorder %s26, 2
      %p208 = por %p206, %p207
      %p210 = scmp.ne.s32.totalorder %s195, %s209
      %p211 = scmp.eq.s32.totalorder %s26, 0
      %p212 = por %p210, %p211
      %s214 = sadd.s32 %s213, 1
      %p217 = scmp.eq.s32.totalorder %s20, 2
      %p218 = scmp.ne.s32.totalorder %s213, %s215
      %p219 = scmp.eq.s32.totalorder %s20, 0
      %p220 = por %p218, %p219
      %p221 = scmp.ne.s32.totalorder %s213, %s215
      %p222 = scmp.eq.s32.totalorder %s25, 2
      %p223 = por %p221, %p222
      %p224 = scmp.ne.s32.totalorder %s215, %s216
      %p225 = scmp.eq.s32.totalorder %s25, 0
      %p226 = por %p224, %p225
      %p227 = scmp.ne.s32.totalorder %s215, %s216
      %p228 = scmp.eq.s32.totalorder %s26, 2
      %p229 = por %p227, %p228
      %p231 = scmp.ne.s32.totalorder %s216, %s230
      %p232 = scmp.eq.s32.totalorder %s26, 0
      %p233 = por %p231, %p232
      %s234 = ssub.s32 %s28, %s35
      %p235 = scmp.eq.s32.totalorder %s234, 0
      %s237 = sadd.s32 %s236, 1
      %s238 = scalar_select %p235, %s236, %s237
      %p241 = pneg %p235
      %p242 = scmp.eq.s32.totalorder %s20, 2
      %p243 = por %p241, %p242
      %p244 = scmp.ne.s32.totalorder %s236, %s239
      %p245 = scmp.eq.s32.totalorder %s20, 0
      %p246 = por %p244, %p245
      %p247 = scmp.ne.s32.totalorder %s236, %s239
      %p248 = scmp.eq.s32.totalorder %s25, 2
      %p249 = por %p247, %p248
      %p250 = scmp.ne.s32.totalorder %s239, %s240
      %p251 = scmp.eq.s32.totalorder %s25, 0
      %p252 = por %p250, %p251
      %p253 = scmp.ne.s32.totalorder %s239, %s240
      %p254 = scmp.eq.s32.totalorder %s26, 2
      %p255 = por %p253, %p254
      %p257 = scmp.ne.s32.totalorder %s240, %s256
      %p258 = scmp.eq.s32.totalorder %s26, 0
      %p259 = por %p257, %p258
      %p260 = scmp.le.s32.totalorder 1, %s20
      %p261 = scmp.lt.s32.totalorder %s20, 4
      %p262 = pnand %p260, %p261
      %p263 = pneg %p262
      // Predicated region
      $region9: #{tpu_custom_call.1} parent=5 // pred_check
        _
      $region10: #{tpu_custom_call.1} parent=5 // pred_check_branch
        %265 = sbr.rel (%p262) target = $region12
      $region11: #{tpu_custom_call.1} parent=5 // pred_region
        %s266 = ssub.s32 %s20, 1
        // Predicated region
        $region13: #{tpu_custom_call.1} parent=11 // pred_check
          %p267 = pneg %p58
        $region14: #{tpu_custom_call.1} parent=11 // pred_check_branch
          %269 = sbr.rel (%p267) target = $region16
        $region15: #{tpu_custom_call.1} parent=11 // pred_region
          %s271 = ssub.s32 128, 128
          %272 = vsyncadd [#allocation8], %s271
          %s273 = smul.addr %s30, 128
          %s274 = scalar_lea.hbm %s0, %s273
          %s276 = sshll.u32 [#allocation7], 4
          %s277 = int_to_ptr.vmem [resolvable:$true] %s276
          %279 = dma.hbm_to_vmem [thread:$0]  %s274, 128, %s277, [#allocation8]
        $region16: #{tpu_custom_call.1} parent=11 // pred_fallthru
          _
        // Predicated region
        $region17: #{tpu_custom_call.1} parent=11 // pred_check
          %p280 = pneg %p79
        $region18: #{tpu_custom_call.1} parent=11 // pred_check_branch
          %282 = sbr.rel (%p280) target = $region20
        $region19: #{tpu_custom_call.1} parent=11 // pred_region
          %s284 = ssub.s32 512, 512
          %285 = vsyncadd [#allocation11], %s284
          %s286 = sshll.u32 [#allocation10], 4
          %s287 = int_to_ptr.vmem [resolvable:$true] %s286
          %292 = dma.hbm_to_vmem [thread:$0]  %s1, 512, %s287, [#allocation11], 128, 128, 8
        $region20: #{tpu_custom_call.1} parent=11 // pred_fallthru
          _
        // Predicated region
        $region21: #{tpu_custom_call.1} parent=11 // pred_check
          %p293 = pneg %p100
        $region22: #{tpu_custom_call.1} parent=11 // pred_check_branch
          %295 = sbr.rel (%p293) target = $region24
        $region23: #{tpu_custom_call.1} parent=11 // pred_region
          _
        $region24: #{tpu_custom_call.1} parent=11 // pred_fallthru
          _
        // Predicated region
        $region25: #{tpu_custom_call.1} parent=11 // pred_check
          %p296 = pneg %p121
        $region26: #{tpu_custom_call.1} parent=11 // pred_check_branch
          %298 = sbr.rel (%p296) target = $region28
        $region27: #{tpu_custom_call.1} parent=11 // pred_region
          _
        $region28: #{tpu_custom_call.1} parent=11 // pred_fallthru
          _
        // Predicated region
        $region29: #{tpu_custom_call.1} parent=11 // pred_check
          %p299 = pneg %p142
        $region30: #{tpu_custom_call.1} parent=11 // pred_check_branch
          %301 = sbr.rel (%p299) target = $region32
        $region31: #{tpu_custom_call.1} parent=11 // pred_region
          %s303 = ssub.s32 4096, 4096
          %304 = vsyncadd [#allocation11], %s303
          %s305 = sshll.u32 [#allocation12], 4
          %s306 = int_to_ptr.vmem [resolvable:$true] %s305
          %311 = dma.hbm_to_vmem [thread:$0]  %s4, 4096, %s306, [#allocation11], 128, 128, 8
        $region32: #{tpu_custom_call.1} parent=11 // pred_fallthru
          _
        // Predicated region
        $region33: #{tpu_custom_call.1} parent=11 // pred_check
          %p312 = pneg %p163
        $region34: #{tpu_custom_call.1} parent=11 // pred_check_branch
          %314 = sbr.rel (%p312) target = $region36
        $region35: #{tpu_custom_call.1} parent=11 // pred_region
          _
        $region36: #{tpu_custom_call.1} parent=11 // pred_fallthru
          _
        // Predicated region
        $region37: #{tpu_custom_call.1} parent=11 // pred_check
          %p315 = pneg %p184
        $region38: #{tpu_custom_call.1} parent=11 // pred_check_branch
          %317 = sbr.rel (%p315) target = $region40
        $region39: #{tpu_custom_call.1} parent=11 // pred_region
          _
        $region40: #{tpu_custom_call.1} parent=11 // pred_fallthru
          _
        // Predicated region
        $region41: #{tpu_custom_call.1} parent=11 // pred_check
          %p318 = pneg %p205
        $region42: #{tpu_custom_call.1} parent=11 // pred_check_branch
          %320 = sbr.rel (%p318) target = $region44
        $region43: #{tpu_custom_call.1} parent=11 // pred_region
          _
        $region44: #{tpu_custom_call.1} parent=11 // pred_fallthru
          _
        // Predicated region
        $region45: #{tpu_custom_call.1} parent=11 // pred_check
          %p321 = pneg %p226
        $region46: #{tpu_custom_call.1} parent=11 // pred_check_branch
          %323 = sbr.rel (%p321) target = $region48
        $region47: #{tpu_custom_call.1} parent=11 // pred_region
          _
        $region48: #{tpu_custom_call.1} parent=11 // pred_fallthru
          _
      $region12: #{tpu_custom_call.1} parent=5 // pred_fallthru
        _
      %p324 = scmp.lt.s32.totalorder %s20, 3
      // Predicated region
      $region49: #{tpu_custom_call.1} parent=5 // pred_check
        %p325 = pneg %p324
      $region50: #{tpu_custom_call.1} parent=5 // pred_check_branch
        %327 = sbr.rel (%p325) target = $region52
      $region51: #{tpu_custom_call.1} parent=5 // pred_region
        _
      $region52: #{tpu_custom_call.1} parent=5 // pred_fallthru
        _
      %p328 = scmp.le.s32.totalorder 1, %s20
      %p329 = scmp.lt.s32.totalorder %s20, 4
      %p330 = pnand %p328, %p329
      %p331 = pneg %p330
      // Predicated region
      $region53: #{tpu_custom_call.1} parent=5 // pred_check
        _
      $region54: #{tpu_custom_call.1} parent=5 // pred_check_branch
        %333 = sbr.rel (%p330) target = $region56
      $region55: #{tpu_custom_call.1} parent=5 // pred_region
        %s334 = ssub.s32 %s20, 1
        // Predicated region
        $region57: #{tpu_custom_call.1} parent=55 // pred_check
          %p335 = pneg %p58
        $region58: #{tpu_custom_call.1} parent=55 // pred_check_branch
          %337 = sbr.rel (%p335) target = $region60
        $region59: #{tpu_custom_call.1} parent=55 // pred_region
          %338 = dma.done [#allocation8], 128
        $region60: #{tpu_custom_call.1} parent=55 // pred_fallthru
          _
        // Predicated region
        $region61: #{tpu_custom_call.1} parent=55 // pred_check
          %p339 = pneg %p79
        $region62: #{tpu_custom_call.1} parent=55 // pred_check_branch
          %341 = sbr.rel (%p339) target = $region64
        $region63: #{tpu_custom_call.1} parent=55 // pred_region
          %342 = dma.done [#allocation11], 512
        $region64: #{tpu_custom_call.1} parent=55 // pred_fallthru
          _
        // Predicated region
        $region65: #{tpu_custom_call.1} parent=55 // pred_check
          %p343 = pneg %p142
        $region66: #{tpu_custom_call.1} parent=55 // pred_check_branch
          %345 = sbr.rel (%p343) target = $region68
        $region67: #{tpu_custom_call.1} parent=55 // pred_region
          %346 = dma.done [#allocation11], 4096
        $region68: #{tpu_custom_call.1} parent=55 // pred_fallthru
          _
        %p347 = pneg %p58
        %p348 = pneg %p55
        %p349 = pneg %p79
        %p350 = pneg %p76
        %p351 = pneg %p100
        %p352 = pneg %p97
        %p353 = pneg %p121
        %p354 = pneg %p118
        %p355 = pneg %p142
        %p356 = pneg %p139
        %p357 = pneg %p163
        %p358 = pneg %p160
        %p359 = pneg %p184
        %p360 = pneg %p181
        %p361 = pneg %p205
        %p362 = pneg %p202
        %p363 = pneg %p226
        %p364 = pneg %p223
        %p365 = pneg %p252
        %p366 = pneg %p249
        %p368 = scmp.eq.s32.totalorder %s29, 0
        %p369 = scmp.eq.s32.totalorder %s30, 0
        %p370 = pnand %p368, %p369
        %p371 = pneg %p370
        // Predicated region
        $region69: #{tpu_custom_call.1} parent=55 // pred_check
          _
        $region70: #{tpu_custom_call.1} parent=55 // pred_check_branch
          %373 = sbr.rel (%p370) target = $region72
        $region71: #{tpu_custom_call.1} parent=55 // pred_region
          %v374 = vlaneseq
          %vm375 = vcmp.ge.s32.totalorder %v374, 0
          %vm376 = vcmp.lt.s32.totalorder %v374, 256
          %vm377 = vmand %vm375, %vm376
          %378 = vst.msk [vmem:[#allocation2] sm:$0x3] %vm377, 0.0
          %379 = vst.msk [vmem:[#allocation3] sm:$0x3] %vm377, 0.0
          %380 = vst.msk [vmem:[#allocation4] sm:$0x3] %vm377, 0.0
          %381 = vst.msk [vmem:[#allocation5] sm:$0x3] %vm377, 0.0
        $region72: #{tpu_custom_call.1} parent=55 // pred_fallthru
          _
        %v382 = vld [vmem:[#allocation7] sm:$0xff]
        %v383 = vpack.c.bf16 %v382, %v382
        %v384 = vld [vmem:[#allocation10] sm:$0xff]
        %v385 = vld [vmem:[#allocation10 + $0x8] sm:$0xff]
        %v386 = vld [vmem:[#allocation10 + $0x10] sm:$0xff]
        %v387 = vld [vmem:[#allocation10 + $0x18] sm:$0xff]
        %v392 = vunpack.c.l.b16 %v384
        %v393 = vunpack.c.h.b16 %v384
        %v394 = vunpack.c.l.b16 %v385
        %v395 = vunpack.c.h.b16 %v385
        %v396 = vunpack.c.l.b16 %v386
        %v397 = vunpack.c.h.b16 %v386
        %v398 = vunpack.c.l.b16 %v387
        %v399 = vunpack.c.h.b16 %v387
        %v400 = vpack.c.b16 %v394, %v392
        %v401 = vpack.c.b16 %v395, %v393
        %v402 = vpack.c.b16 %v398, %v396
        %v403 = vpack.c.b16 %v399, %v397
        %vm408 = vcmask 261120
        %v410 = vsel %vm408, %v383, 0
        %412 = vmatprep.subr.bf16.mxu0 0
        %413 = vmatpush1.bf16.msra.mxu0 0
        %414 = vmatprep.subr.bf16.mxu0 0
        %415 = vmatpush1.bf16.msra.mxu0 0
        %416 = vmatprep.subr.bf16.mxu0 0
        %417 = vmatpush1.bf16.msra.mxu0 0
        %418 = vmatprep.subr.bf16.mxu0 0
        %419 = vmatpush1.bf16.msra.mxu0 0
        %420 = vmatprep.subr.bf16.mxu0 0
        %421 = vmatpush1.bf16.msra.mxu0 0
        %422 = vmatprep.subr.bf16.mxu0 0
        %423 = vmatpush1.bf16.msra.mxu0 0
        %424 = vmatprep.subr.bf16.mxu0 %v403
        %425 = vmatpush1.bf16.msra.mxu0 %v402
        %426 = vmatprep.subr.bf16.mxu0 %v401
        %427 = vmatpush1.bf16.msra.mxu0 %v400
        %428 = vmatprep.subr.bf16.mxu0 0
        %429 = vmatpush2.bf16.msra.mxu0 0
        %430 = vmatprep.subr.bf16.mxu0 0
        %431 = vmatpush2.bf16.msra.mxu0 0
        %432 = vmatprep.subr.bf16.mxu0 0
        %433 = vmatpush2.bf16.msra.mxu0 0
        %434 = vmatprep.subr.bf16.mxu0 0
        %435 = vmatpush2.bf16.msra.mxu0 0
        %436 = vmatprep.subr.bf16.mxu0 0
        %437 = vmatpush2.bf16.msra.mxu0 0
        %438 = vmatprep.subr.bf16.mxu0 0
        %439 = vmatpush2.bf16.msra.mxu0 0
        %440 = vmatprep.subr.bf16.mxu0 0
        %441 = vmatpush2.bf16.msra.mxu0 0
        %442 = vmatprep.subr.bf16.mxu0 0
        %443 = vmatpush2.bf16.msra.mxu0 0
        %444 = vmatprep.mubr.bf16.mxu0 0
        %445 = vmatmul.mubr.bf16.gmra.mxu0 %v410
        %v446 = vpop.f32.mrf.mxu0
        %v447 = vadd.f32 0.0, %v446
        %v448 = vpop.f32.mrf.mxu0
        %v449 = vadd.f32 0.0, %v448
        %v450 = vpop.f32.mrf.mxu0
        %v451 = vpop.f32.mrf.mxu0
        %452 = vdwg.mxu0
        // Predicated region
        $region73: #{tpu_custom_call.1} parent=55 // pred_check
          %p453 = pneg %p368
        $region74: #{tpu_custom_call.1} parent=55 // pred_check_branch
          %455 = sbr.rel (%p453) target = $region76
        $region75: #{tpu_custom_call.1} parent=55 // pred_region
          %v456 = vld [vmem:[#allocation2] sm:$0x3]
          %v457 = vrot.slane %v447, 4
          %v458 = vadd.f32 %v447, %v457
          %v459 = vrot.slane %v458, 2
          %v460 = vadd.f32 %v458, %v459
          %v461 = vrot.slane %v460, 1
          %v462 = vadd.f32 %v460, %v461
          %v463 = vrot.slane %v449, 4
          %v464 = vadd.f32 %v449, %v463
          %v465 = vrot.slane %v464, 2
          %v466 = vadd.f32 %v464, %v465
          %v467 = vrot.slane %v466, 1
          %v468 = vadd.f32 %v466, %v467
          %v471 = vcombine.low %v462, %v468
          %v473 = vunpack.c.l.s4 1966171168
          %v474 = vunpack.c.0.s8 %v473
          %v475 = vlaneseq
          %v476 = vshrl.u32 %v475, 7
          %v477 = vsub.s32 %v474, %v476
          %v478 = vrot.slane %v471, %v477
          %v480 = vunpack.c.l.s4 1966171168
          %v481 = vunpack.c.0.s8 %v480
          %v482 = vlaneseq
          %v483 = vshrl.u32 %v482, 7
          %v484 = vsub.s32 %v481, %v483
          %v485 = vrot.slane %v478, %v484
          %v487 = vadd.f32 %v456, %v485
          %v488 = vlaneseq
          %vm489 = vcmp.ge.s32.totalorder %v488, 0
          %vm490 = vcmp.lt.s32.totalorder %v488, 256
          %vm491 = vmand %vm489, %vm490
          %492 = vst.msk [vmem:[#allocation2] sm:$0x3] %vm491, %v487
          %v493 = vld [vmem:[#allocation3] sm:$0x3]
          %v494 = vmul.f32 %v447, %v447
          %v495 = vmul.f32 %v449, %v449
          %v496 = vrot.slane %v494, 4
          %v497 = vadd.f32 %v494, %v496
          %v498 = vrot.slane %v497, 2
          %v499 = vadd.f32 %v497, %v498
          %v500 = vrot.slane %v499, 1
          %v501 = vadd.f32 %v499, %v500
          %v502 = vrot.slane %v495, 4
          %v503 = vadd.f32 %v495, %v502
          %v504 = vrot.slane %v503, 2
          %v505 = vadd.f32 %v503, %v504
          %v506 = vrot.slane %v505, 1
          %v507 = vadd.f32 %v505, %v506
          %v510 = vcombine.low %v501, %v507
          %v512 = vunpack.c.l.s4 1966171168
          %v513 = vunpack.c.0.s8 %v512
          %v514 = vlaneseq
          %v515 = vshrl.u32 %v514, 7
          %v516 = vsub.s32 %v513, %v515
          %v517 = vrot.slane %v510, %v516
          %v519 = vunpack.c.l.s4 1966171168
          %v520 = vunpack.c.0.s8 %v519
          %v521 = vlaneseq
          %v522 = vshrl.u32 %v521, 7
          %v523 = vsub.s32 %v520, %v522
          %v524 = vrot.slane %v517, %v523
          %v526 = vadd.f32 %v493, %v524
          %527 = vst.msk [vmem:[#allocation3] sm:$0x3] %vm491, %v526
        $region76: #{tpu_custom_call.1} parent=55 // pred_fallthru
          _
        %p528 = scmp.gt.s32.totalorder %s29, 0
        // Predicated region
        $region77: #{tpu_custom_call.1} parent=55 // pred_check
          %p529 = pneg %p528
        $region78: #{tpu_custom_call.1} parent=55 // pred_check_branch
          %531 = sbr.rel (%p529) target = $region80
        $region79: #{tpu_custom_call.1} parent=55 // pred_region
          %v532 = vld [vmem:[%s2] sm:$0x3]
          %v533 = vld [vmem:[%s3] sm:$0x3]
          %v534 = vld [vmem:[#allocation2] sm:$0x3]
          %v535 = vmul.f32 %v534, 0.125
          %v536 = vld [vmem:[#allocation3] sm:$0x3]
          %v537 = vmul.f32 %v536, 0.125
          %v538 = vmul.f32 %v535, %v535
          %v539 = vsub.f32 %v537, %v538
          %v540 = vmax.f32 %v539, 0.0
          %v541 = vadd.f32 %v540, 1e-05
          %v542 = vrsqrt.pop %v541
          %v543 = vmul.f32 %v532, %v542
          %v544 = vmul.f32 %v535, %v543
          %v545 = vsub.f32 %v533, %v544
          %v547 = vlaneseq
          %v548 = vshrl.u32 %v547, 7
          %v549 = vsub.s32 0, %v548
          %v550 = vrot.slane %v543, %v549
          %v551 = vlaneseq
          %v552 = vshrl.u32 %v551, 7
          %v553 = vsub.s32 1, %v552
          %v554 = vrot.slane %v543, %v553
          %v557 = vmul.f32 %v447, %v550
          %v558 = vmul.f32 %v449, %v554
          %v560 = vlaneseq
          %v561 = vshrl.u32 %v560, 7
          %v562 = vsub.s32 0, %v561
          %v563 = vrot.slane %v545, %v562
          %v564 = vlaneseq
          %v565 = vshrl.u32 %v564, 7
          %v566 = vsub.s32 1, %v565
          %v567 = vrot.slane %v545, %v566
          %v570 = vadd.f32 %v557, %v563
          %v571 = vadd.f32 %v558, %v567
          %v572 = vmul.f32 %v570, 0.01
          %v573 = vmul.f32 %v571, 0.01
          %v574 = vmax.f32 %v570, %v572
          %v575 = vmax.f32 %v571, %v573
          %v576 = vpack.c.bf16 %v574, %v574
          %v577 = vpack.c.bf16 %v575, %v575
          %v578 = vld [vmem:[#allocation12] sm:$0xff]
          %v579 = vld [vmem:[#allocation12 + $0x8] sm:$0xff]
          %v580 = vld [vmem:[#allocation12 + $0x10] sm:$0xff]
          %v581 = vld [vmem:[#allocation12 + $0x18] sm:$0xff]
          %v582 = vld [vmem:[#allocation12 + $0x20] sm:$0xff]
          %v583 = vld [vmem:[#allocation12 + $0x28] sm:$0xff]
          %v584 = vld [vmem:[#allocation12 + $0x30] sm:$0xff]
          %v585 = vld [vmem:[#allocation12 + $0x38] sm:$0xff]
          %v586 = vld [vmem:[#allocation12 + $0x40] sm:$0xff]
          %v587 = vld [vmem:[#allocation12 + $0x48] sm:$0xff]
          %v588 = vld [vmem:[#allocation12 + $0x50] sm:$0xff]
          %v589 = vld [vmem:[#allocation12 + $0x58] sm:$0xff]
          %v590 = vld [vmem:[#allocation12 + $0x60] sm:$0xff]
          %v591 = vld [vmem:[#allocation12 + $0x68] sm:$0xff]
          %v592 = vld [vmem:[#allocation12 + $0x70] sm:$0xff]
          %v593 = vld [vmem:[#allocation12 + $0x78] sm:$0xff]
          %v594 = vld [vmem:[#allocation12 + $0x80] sm:$0xff]
          %v595 = vld [vmem:[#allocation12 + $0x88] sm:$0xff]
          %v596 = vld [vmem:[#allocation12 + $0x90] sm:$0xff]
          %v597 = vld [vmem:[#allocation12 + $0x98] sm:$0xff]
          %v598 = vld [vmem:[#allocation12 + $0xa0] sm:$0xff]
          %v599 = vld [vmem:[#allocation12 + $0xa8] sm:$0xff]
          %v600 = vld [vmem:[#allocation12 + $0xb0] sm:$0xff]
          %v601 = vld [vmem:[#allocation12 + $0xb8] sm:$0xff]
          %v602 = vld [vmem:[#allocation12 + $0xc0] sm:$0xff]
          %v603 = vld [vmem:[#allocation12 + $0xc8] sm:$0xff]
          %v604 = vld [vmem:[#allocation12 + $0xd0] sm:$0xff]
          %v605 = vld [vmem:[#allocation12 + $0xd8] sm:$0xff]
          %v606 = vld [vmem:[#allocation12 + $0xe0] sm:$0xff]
          %v607 = vld [vmem:[#allocation12 + $0xe8] sm:$0xff]
          %v608 = vld [vmem:[#allocation12 + $0xf0] sm:$0xff]
          %v609 = vld [vmem:[#allocation12 + $0xf8] sm:$0xff]
          %v642 = vunpack.c.l.b16 %v578
          %v643 = vunpack.c.h.b16 %v578
          %v644 = vunpack.c.l.b16 %v579
          %v645 = vunpack.c.h.b16 %v579
          %v646 = vunpack.c.l.b16 %v580
          %v647 = vunpack.c.h.b16 %v580
          %v648 = vunpack.c.l.b16 %v581
          %v649 = vunpack.c.h.b16 %v581
          %v650 = vunpack.c.l.b16 %v582
          %v651 = vunpack.c.h.b16 %v582
          %v652 = vunpack.c.l.b16 %v583
          %v653 = vunpack.c.h.b16 %v583
          %v654 = vunpack.c.l.b16 %v584
          %v655 = vunpack.c.h.b16 %v584
          %v656 = vunpack.c.l.b16 %v585
          %v657 = vunpack.c.h.b16 %v585
          %v658 = vunpack.c.l.b16 %v586
          %v659 = vunpack.c.h.b16 %v586
          %v660 = vunpack.c.l.b16 %v587
          %v661 = vunpack.c.h.b16 %v587
          %v662 = vunpack.c.l.b16 %v588
          %v663 = vunpack.c.h.b16 %v588
          %v664 = vunpack.c.l.b16 %v589
          %v665 = vunpack.c.h.b16 %v589
          %v666 = vunpack.c.l.b16 %v590
          %v667 = vunpack.c.h.b16 %v590
          %v668 = vunpack.c.l.b16 %v591
          %v669 = vunpack.c.h.b16 %v591
          %v670 = vunpack.c.l.b16 %v592
          %v671 = vunpack.c.h.b16 %v592
          %v672 = vunpack.c.l.b16 %v593
          %v673 = vunpack.c.h.b16 %v593
          %v674 = vunpack.c.l.b16 %v594
          %v675 = vunpack.c.h.b16 %v594
          %v676 = vunpack.c.l.b16 %v595
          %v677 = vunpack.c.h.b16 %v595
          %v678 = vunpack.c.l.b16 %v596
          %v679 = vunpack.c.h.b16 %v596
          %v680 = vunpack.c.l.b16 %v597
          %v681 = vunpack.c.h.b16 %v597
          %v682 = vunpack.c.l.b16 %v598
          %v683 = vunpack.c.h.b16 %v598
          %v684 = vunpack.c.l.b16 %v599
          %v685 = vunpack.c.h.b16 %v599
          %v686 = vunpack.c.l.b16 %v600
          %v687 = vunpack.c.h.b16 %v600
          %v688 = vunpack.c.l.b16 %v601
          %v689 = vunpack.c.h.b16 %v601
          %v690 = vunpack.c.l.b16 %v602
          %v691 = vunpack.c.h.b16 %v602
          %v692 = vunpack.c.l.b16 %v603
          %v693 = vunpack.c.h.b16 %v603
          %v694 = vunpack.c.l.b16 %v604
          %v695 = vunpack.c.h.b16 %v604
          %v696 = vunpack.c.l.b16 %v605
          %v697 = vunpack.c.h.b16 %v605
          %v698 = vunpack.c.l.b16 %v606
          %v699 = vunpack.c.h.b16 %v606
          %v700 = vunpack.c.l.b16 %v607
          %v701 = vunpack.c.h.b16 %v607
          %v702 = vunpack.c.l.b16 %v608
          %v703 = vunpack.c.h.b16 %v608
          %v704 = vunpack.c.l.b16 %v609
          %v705 = vunpack.c.h.b16 %v609
          %v706 = vpack.c.b16 %v644, %v642
          %v707 = vpack.c.b16 %v645, %v643
          %v708 = vpack.c.b16 %v648, %v646
          %v709 = vpack.c.b16 %v649, %v647
          %v710 = vpack.c.b16 %v652, %v650
          %v711 = vpack.c.b16 %v653, %v651
          %v712 = vpack.c.b16 %v656, %v654
          %v713 = vpack.c.b16 %v657, %v655
          %v714 = vpack.c.b16 %v660, %v658
          %v715 = vpack.c.b16 %v661, %v659
          %v716 = vpack.c.b16 %v664, %v662
          %v717 = vpack.c.b16 %v665, %v663
          %v718 = vpack.c.b16 %v668, %v666
          %v719 = vpack.c.b16 %v669, %v667
          %v720 = vpack.c.b16 %v672, %v670
          %v721 = vpack.c.b16 %v673, %v671
          %v722 = vpack.c.b16 %v676, %v674
          %v723 = vpack.c.b16 %v677, %v675
          %v724 = vpack.c.b16 %v680, %v678
          %v725 = vpack.c.b16 %v681, %v679
          %v726 = vpack.c.b16 %v684, %v682
          %v727 = vpack.c.b16 %v685, %v683
          %v728 = vpack.c.b16 %v688, %v686
          %v729 = vpack.c.b16 %v689, %v687
          %v730 = vpack.c.b16 %v692, %v690
          %v731 = vpack.c.b16 %v693, %v691
          %v732 = vpack.c.b16 %v696, %v694
          %v733 = vpack.c.b16 %v697, %v695
          %v734 = vpack.c.b16 %v700, %v698
          %v735 = vpack.c.b16 %v701, %v699
          %v736 = vpack.c.b16 %v704, %v702
          %v737 = vpack.c.b16 %v705, %v703
          %770 = vmatprep.subr.bf16.mxu0 %v721
          %771 = vmatpush1.bf16.msra.mxu0 %v720
          %772 = vmatprep.subr.bf16.mxu0 %v719
          %773 = vmatpush1.bf16.msra.mxu0 %v718
          %774 = vmatprep.subr.bf16.mxu0 %v717
          %775 = vmatpush1.bf16.msra.mxu0 %v716
          %776 = vmatprep.subr.bf16.mxu0 %v715
          %777 = vmatpush1.bf16.msra.mxu0 %v714
          %778 = vmatprep.subr.bf16.mxu0 %v713
          %779 = vmatpush1.bf16.msra.mxu0 %v712
          %780 = vmatprep.subr.bf16.mxu0 %v711
          %781 = vmatpush1.bf16.msra.mxu0 %v710
          %782 = vmatprep.subr.bf16.mxu0 %v709
          %783 = vmatpush1.bf16.msra.mxu0 %v708
          %784 = vmatprep.subr.bf16.mxu0 %v707
          %785 = vmatpush1.bf16.msra.mxu0 %v706
          %786 = vmatprep.subr.bf16.mxu0 %v737
          %787 = vmatpush2.bf16.msra.mxu0 %v736
          %788 = vmatprep.subr.bf16.mxu0 %v735
          %789 = vmatpush2.bf16.msra.mxu0 %v734
          %790 = vmatprep.subr.bf16.mxu0 %v733
          %791 = vmatpush2.bf16.msra.mxu0 %v732
          %792 = vmatprep.subr.bf16.mxu0 %v731
          %793 = vmatpush2.bf16.msra.mxu0 %v730
          %794 = vmatprep.subr.bf16.mxu0 %v729
          %795 = vmatpush2.bf16.msra.mxu0 %v728
          %796 = vmatprep.subr.bf16.mxu0 %v727
          %797 = vmatpush2.bf16.msra.mxu0 %v726
          %798 = vmatprep.subr.bf16.mxu0 %v725
          %799 = vmatpush2.bf16.msra.mxu0 %v724
          %800 = vmatprep.subr.bf16.mxu0 %v723
          %801 = vmatpush2.bf16.msra.mxu0 %v722
          %802 = vmatprep.mubr.bf16.mxu0 %v577
          %803 = vmatmul.mubr.bf16.gmra.mxu0 %v576
          %v804 = vpop.f32.mrf.mxu0
          %v805 = vadd.f32 0.0, %v804
          %v806 = vpop.f32.mrf.mxu0
          %v807 = vadd.f32 0.0, %v806
          %v808 = vpop.f32.mrf.mxu0
          %v809 = vpop.f32.mrf.mxu0
          %810 = vdwg.mxu0
          %p811 = scmp.eq.s32.totalorder %s29, 1
          // Predicated region
          $region81: #{tpu_custom_call.1} parent=79 // pred_check
            %p812 = pneg %p811
          $region82: #{tpu_custom_call.1} parent=79 // pred_check_branch
            %814 = sbr.rel (%p812) target = $region84
          $region83: #{tpu_custom_call.1} parent=79 // pred_region
            %v815 = vld [vmem:[#allocation4] sm:$0x3]
            %v816 = vrot.slane %v805, 4
            %v817 = vadd.f32 %v805, %v816
            %v818 = vrot.slane %v817, 2
            %v819 = vadd.f32 %v817, %v818
            %v820 = vrot.slane %v819, 1
            %v821 = vadd.f32 %v819, %v820
            %v822 = vrot.slane %v807, 4
            %v823 = vadd.f32 %v807, %v822
            %v824 = vrot.slane %v823, 2
            %v825 = vadd.f32 %v823, %v824
            %v826 = vrot.slane %v825, 1
            %v827 = vadd.f32 %v825, %v826
            %v830 = vcombine.low %v821, %v827
            %v832 = vunpack.c.l.s4 1966171168
            %v833 = vunpack.c.0.s8 %v832
            %v834 = vlaneseq
            %v835 = vshrl.u32 %v834, 7
            %v836 = vsub.s32 %v833, %v835
            %v837 = vrot.slane %v830, %v836
            %v839 = vunpack.c.l.s4 1966171168
            %v840 = vunpack.c.0.s8 %v839
            %v841 = vlaneseq
            %v842 = vshrl.u32 %v841, 7
            %v843 = vsub.s32 %v840, %v842
            %v844 = vrot.slane %v837, %v843
            %v846 = vadd.f32 %v815, %v844
            %v847 = vlaneseq
            %vm848 = vcmp.ge.s32.totalorder %v847, 0
            %vm849 = vcmp.lt.s32.totalorder %v847, 256
            %vm850 = vmand %vm848, %vm849
            %851 = vst.msk [vmem:[#allocation4] sm:$0x3] %vm850, %v846
            %v852 = vld [vmem:[#allocation5] sm:$0x3]
            %v853 = vmul.f32 %v805, %v805
            %v854 = vmul.f32 %v807, %v807
            %v855 = vrot.slane %v853, 4
            %v856 = vadd.f32 %v853, %v855
            %v857 = vrot.slane %v856, 2
            %v858 = vadd.f32 %v856, %v857
            %v859 = vrot.slane %v858, 1
            %v860 = vadd.f32 %v858, %v859
            %v861 = vrot.slane %v854, 4
            %v862 = vadd.f32 %v854, %v861
            %v863 = vrot.slane %v862, 2
            %v864 = vadd.f32 %v862, %v863
            %v865 = vrot.slane %v864, 1
            %v866 = vadd.f32 %v864, %v865
            %v869 = vcombine.low %v860, %v866
            %v871 = vunpack.c.l.s4 1966171168
            %v872 = vunpack.c.0.s8 %v871
            %v873 = vlaneseq
            %v874 = vshrl.u32 %v873, 7
            %v875 = vsub.s32 %v872, %v874
            %v876 = vrot.slane %v869, %v875
            %v878 = vunpack.c.l.s4 1966171168
            %v879 = vunpack.c.0.s8 %v878
            %v880 = vlaneseq
            %v881 = vshrl.u32 %v880, 7
            %v882 = vsub.s32 %v879, %v881
            %v883 = vrot.slane %v876, %v882
            %v885 = vadd.f32 %v852, %v883
            %886 = vst.msk [vmem:[#allocation5] sm:$0x3] %vm850, %v885
          $region84: #{tpu_custom_call.1} parent=79 // pred_fallthru
            _
          %p887 = scmp.eq.s32.totalorder %s29, 2
          // Predicated region
          $region85: #{tpu_custom_call.1} parent=79 // pred_check
            %p888 = pneg %p887
          $region86: #{tpu_custom_call.1} parent=79 // pred_check_branch
            %890 = sbr.rel (%p888) target = $region88
          $region87: #{tpu_custom_call.1} parent=79 // pred_region
            %v891 = vld [vmem:[%s5] sm:$0x3]
            %v892 = vld [vmem:[%s6] sm:$0x3]
            %v893 = vld [vmem:[#allocation4] sm:$0x3]
            %v894 = vmul.f32 %v893, 0.125
            %v895 = vld [vmem:[#allocation5] sm:$0x3]
            %v896 = vmul.f32 %v895, 0.125
            %v897 = vmul.f32 %v894, %v894
            %v898 = vsub.f32 %v896, %v897
            %v899 = vmax.f32 %v898, 0.0
            %v900 = vadd.f32 %v899, 1e-05
            %v901 = vrsqrt.pop %v900
            %v902 = vmul.f32 %v891, %v901
            %v903 = vmul.f32 %v894, %v902
            %v904 = vsub.f32 %v892, %v903
            %v906 = vlaneseq
            %v907 = vshrl.u32 %v906, 7
            %v908 = vsub.s32 0, %v907
            %v909 = vrot.slane %v902, %v908
            %v910 = vlaneseq
            %v911 = vshrl.u32 %v910, 7
            %v912 = vsub.s32 1, %v911
            %v913 = vrot.slane %v902, %v912
            %v916 = vmul.f32 %v805, %v909
            %v917 = vmul.f32 %v807, %v913
            %v919 = vlaneseq
            %v920 = vshrl.u32 %v919, 7
            %v921 = vsub.s32 0, %v920
            %v922 = vrot.slane %v904, %v921
            %v923 = vlaneseq
            %v924 = vshrl.u32 %v923, 7
            %v925 = vsub.s32 1, %v924
            %v926 = vrot.slane %v904, %v925
            %v929 = vadd.f32 %v916, %v922
            %v930 = vadd.f32 %v917, %v926
            %v931 = vmul.f32 %v929, 0.01
            %v932 = vmul.f32 %v930, 0.01
            %v933 = vmax.f32 %v929, %v931
            %v934 = vmax.f32 %v930, %v932
            %v935 = vld [vmem:[%s7] sm:$0x3]
            %v936 = vpack.c.bf16 %v933, %v933
            %v937 = vpack.c.bf16 %v934, %v934
            %v938 = vld [vmem:[#allocation6] sm:$0x1]
            %940 = vset.pattern.permute.xlu0 0
            %941 = vperm.xlu0 %940, %v938
            %v942 = vpop.permute.xlu0 %941
            %v944 = vlaneseq
            %v945 = vshrl.u32 %v944, 7
            %v946 = vsub.s32 0, %v945
            %v947 = vrot.slane %v942, %v946
            %v950 = vunpack.c.l.s4 1966171168
            %v951 = vunpack.c.0.s8 %v950
            %v952 = vlaneseq
            %v953 = vshrl.u32 %v952, 7
            %v954 = vsub.s32 %v951, %v953
            %v955 = vrot.slane %v935, %v954
            %v956 = vcombine.high %v955, %v955
            %v958 = vunpack.c.l.s4 1966171168
            %v959 = vunpack.c.0.s8 %v958
            %v960 = vlaneseq
            %v961 = vshrl.u32 %v960, 7
            %v962 = vsub.s32 %v959, %v961
            %v963 = vrot.slane %v955, %v962
            %v965 = vunpack.c.l.s4 1966171168
            %v966 = vunpack.c.0.s8 %v965
            %v967 = vlaneseq
            %v968 = vshrl.u32 %v967, 7
            %v969 = vsub.s32 %v966, %v968
            %v970 = vrot.slane %v956, %v969
            %973 = vmatprep.subr.bf16.mxu0 0
            %974 = vmatpush1.bf16.xpose.msra.mxu0 0
            %975 = vmatprep.subr.bf16.mxu0 0
            %976 = vmatpush1.bf16.xpose.msra.mxu0 0
            %977 = vmatprep.subr.bf16.mxu0 0
            %978 = vmatpush1.bf16.xpose.msra.mxu0 0
            %979 = vmatprep.subr.bf16.mxu0 0
            %980 = vmatpush1.bf16.xpose.msra.mxu0 0
            %981 = vmatprep.subr.bf16.mxu0 0
            %982 = vmatpush1.bf16.xpose.msra.mxu0 0
            %983 = vmatprep.subr.bf16.mxu0 0
            %984 = vmatpush1.bf16.xpose.msra.mxu0 0
            %985 = vmatprep.subr.bf16.mxu0 0
            %986 = vmatpush1.bf16.xpose.msra.mxu0 0
            %987 = vmatprep.subr.bf16.mxu0 %v937
            %988 = vmatpush1.bf16.xpose.msra.mxu0 %v936
            %989 = vmatprep.subr.bf16.mxu0 0
            %990 = vmatpush2.bf16.xpose.msra.mxu0 0
            %991 = vmatprep.subr.bf16.mxu0 0
            %992 = vmatpush2.bf16.xpose.msra.mxu0 0
            %993 = vmatprep.subr.bf16.mxu0 0
            %994 = vmatpush2.bf16.xpose.msra.mxu0 0
            %995 = vmatprep.subr.bf16.mxu0 0
            %996 = vmatpush2.bf16.xpose.msra.mxu0 0
            %997 = vmatprep.subr.bf16.mxu0 0
            %998 = vmatpush2.bf16.xpose.msra.mxu0 0
            %999 = vmatprep.subr.bf16.mxu0 0
            %1000 = vmatpush2.bf16.xpose.msra.mxu0 0
            %1001 = vmatprep.subr.bf16.mxu0 0
            %1002 = vmatpush2.bf16.xpose.msra.mxu0 0
            %1003 = vmatprep.subr.bf16.mxu0 0
            %1004 = vmatpush2.bf16.xpose.msra.mxu0 0
            %1005 = vmatprep.mubr.bf16.mxu0 %v970
            %1006 = vmatmul.mubr.bf16.gmra.mxu0 %v963
            %v1007 = vpop.f32.mrf.mxu0
            %v1008 = vadd.f32 %v947, %v1007
            %v1009 = vpop.f32.mrf.mxu0
            %v1010 = vpop.f32.mrf.mxu0
            %v1011 = vpop.f32.mrf.mxu0
            %1012 = vdwg.mxu0
            %v1013 = vsub.f32 0.0, %v1008
            %v1014 = vmul.f32 %v1013, 1.442695
            %v1015 = vpow.pop %v1014
            %v1016 = vadd.f32 %v1015, 1.0
            %v1017 = vrcp.pop %v1016
            %vm1018 = vcmask 57344
            %1019 = vst.msk [vmem:[#allocation13] sm:$0x1] %vm1018, %v1017
          $region88: #{tpu_custom_call.1} parent=79 // pred_fallthru
            _
        $region80: #{tpu_custom_call.1} parent=55 // pred_fallthru
          _
        // Predicated region
        $region89: #{tpu_custom_call.1} parent=55 // pred_check
          %p1020 = pneg %p249
        $region90: #{tpu_custom_call.1} parent=55 // pred_check_branch
          %1022 = sbr.rel (%p1020) target = $region92
        $region91: #{tpu_custom_call.1} parent=55 // pred_region
          %s1024 = ssub.s32 16, 16
          %1025 = vsyncadd [#allocation9], %s1024
          %s1026 = smul.addr %s30, 16
          %s1027 = scalar_lea.hbm %s9, %s1026
          %s1029 = sshll.u32 [#allocation13], 4
          %s1030 = int_to_ptr.vmem [resolvable:$true] %s1029
          %1032 = dma.vmem_to_hbm [thread:$0]  %s1030, 16, %s1027, [#allocation9]
        $region92: #{tpu_custom_call.1} parent=55 // pred_fallthru
          _
        // Predicated region
        $region93: #{tpu_custom_call.1} parent=55 // pred_check
          %p1033 = pneg %p249
        $region94: #{tpu_custom_call.1} parent=55 // pred_check_branch
          %1035 = sbr.rel (%p1033) target = $region96
        $region95: #{tpu_custom_call.1} parent=55 // pred_region
          %1036 = dma.done [#allocation9], 16
        $region96: #{tpu_custom_call.1} parent=55 // pred_fallthru
          _
      $region56: #{tpu_custom_call.1} parent=5 // pred_fallthru
        _
      %p1037 = scmp.le.s32.totalorder 2, %s20
      // Predicated region
      $region97: #{tpu_custom_call.1} parent=5 // pred_check
        %p1038 = pneg %p1037
      $region98: #{tpu_custom_call.1} parent=5 // pred_check_branch
        %1040 = sbr.rel (%p1038) target = $region100
      $region99: #{tpu_custom_call.1} parent=5 // pred_region
        %s1041 = ssub.s32 %s20, 2
      $region100: #{tpu_custom_call.1} parent=5 // pred_fallthru
        _
    $region6: #{tpu_custom_call.1} parent=1 // loop_footer
      %s24 = sadd.s32 1, %s20
    $region7: #{tpu_custom_call.1} parent=1 // loop_footer_branch
      %19 = sbr.rel target = $region3
    $region8: #{tpu_custom_call.1} parent=1 // loop_exit
      _
    %1042 = vsyncpa [#allocation8], 1
    %s1043 = scalar_lea.sflag [#allocation8], 1
    %1044 = vsyncpa %s1043, 1
    %1045 = vsyncpa [#allocation11], 1
    %1046 = vsyncpa [#allocation9], 1
    %s1047 = scalar_lea.sflag [#allocation9], 1
    %1048 = vsyncpa %s1047, 1

</llo_original>
